<compile_context>
chip_gen: v6e
topology: v6e:2x2x1
jax: 0.10.0
libtpu: 0.0.40
codegen_flags: <defaults>
</compile_context>

<pallas_src>
import numpy as np
import jax
import jax.numpy as jnp
from jax.experimental import pallas as pl
from jax.experimental.pallas import tpu as pltpu


def _round_up(n, m):
    return ((max(n, 1) + m - 1) // m) * m


def _freudenthal_cells(h, w):
    """Freudenthal triangulation of an h x w grid (row-major vertex ids),
    matching topologylayer.util.construction.init_freudenthal_2d."""
    cells = []
    for i in range(h):
        for j in range(w):
            cells.append((i * w + j,))
    for i in range(h):
        for j in range(w - 1):
            v = i * w + j
            cells.append((v, v + 1))
    for i in range(h - 1):
        for j in range(w):
            v = i * w + j
            cells.append((v, v + w))
    for i in range(h - 1):
        for j in range(w - 1):
            v = i * w + j
            cells.append((v, v + w + 1))          # diagonal edge
            cells.append((v, v + 1, v + w + 1))   # upper triangle
            cells.append((v, v + w, v + w + 1))   # lower triangle
    return cells


def _persistence_pairs(g_flat, cells):
    """Standard persistence (GF(2) boundary-matrix reduction) of the
    vertex-induced sublevel filtration of g on the given complex.
    Returns critical-vertex index arrays (b0, d0, b1, d1) for all finite
    dim-0 and dim-1 pairs.  Purely combinatorial -> runs on the host."""
    n = len(cells)
    dims = np.array([len(c) - 1 for c in cells], dtype=np.int32)
    vals = np.empty(n, dtype=np.float64)
    reps = np.empty(n, dtype=np.int32)
    for ci, c in enumerate(cells):
        vs = np.asarray(c, dtype=np.int64)
        gv = g_flat[vs]
        k = int(np.argmax(gv))
        vals[ci] = gv[k]
        reps[ci] = vs[k]
    order = sorted(range(n), key=lambda ci: (vals[ci], dims[ci], ci))
    pos = {ci: p for p, ci in enumerate(order)}
    key_to_pos = {frozenset(cells[ci]): pos[ci] for ci in range(n)}

    columns = []
    for ci in order:
        c = cells[ci]
        if len(c) == 1:
            columns.append(set())
        else:
            bnd = set()
            for omit in range(len(c)):
                face = frozenset(c[:omit] + c[omit + 1:])
                bnd.add(key_to_pos[face])
            columns.append(bnd)

    low_to_col = {}
    pairs = []
    for p in range(n):
        col = columns[p]
        while col:
            low = max(col)
            if low in low_to_col:
                col ^= columns[low_to_col[low]]
            else:
                low_to_col[low] = p
                pairs.append((low, p))
                break

    b0, d0, b1, d1 = [], [], [], []
    for low, p in pairs:
        ci_b, ci_d = order[low], order[p]
        if dims[ci_b] == 0:
            b0.append(reps[ci_b]); d0.append(reps[ci_d])
        elif dims[ci_b] == 1:
            b1.append(reps[ci_b]); d1.append(reps[ci_d])
    return (np.asarray(b0, np.int32), np.asarray(d0, np.int32),
            np.asarray(b1, np.int32), np.asarray(d1, np.int32))


def _toploss_kernel(beta_ref, c_ref, selT_ref, out_ref, s_acc, l1_acc):
    """Grid axis 0 tiles the (padded) vertex dimension NV.

    beta_ref : (1, TNV)  f32   image values (row-major, zero padded)
    c_ref    : (1, TNV)  f32   signed critical-vertex counts (births - deaths)
    selT_ref : (TNV, P1) f32   signed one-hot for dim-1 pairs (+1 birth / -1 death)
    out_ref  : (1, 1)    f32   scalar loss
    s_acc    : (1, 1)    f32   running sum(c * beta)          (VMEM scratch)
    l1_acc   : (1, P1)   f32   running dim-1 bar lengths      (VMEM scratch)
    """
    k = pl.program_id(0)

    @pl.when(k == 0)
    def _():
        s_acc[...] = jnp.zeros_like(s_acc)
        l1_acc[...] = jnp.zeros_like(l1_acc)

    beta = beta_ref[...]                                          # (1, TNV)

    # SumBarcodeLengths(dim=0) + sum part of dim=1: linear in beta -> O(NV).
    s_acc[...] += jnp.sum(c_ref[...] * beta, axis=1, keepdims=True)

    # Per-pair dim-1 lengths via one MXU matvec (partial sums over the NV tiles).
    l1_acc[...] += jnp.dot(beta, selT_ref[...],
                           preferred_element_type=jnp.float32)    # (1, P1)

    @pl.when(k == pl.num_programs(0) - 1)
    def _():
        # PartialSumBarcodeLengths(dim=1, skip=1) == sum(l1) - max(l1)
        # (lengths are >= 0; padded columns are exactly 0).
        m1 = jnp.max(l1_acc[...], axis=1, keepdims=True)
        out_ref[...] = s_acc[...] - m1


class TopLossPallas:
    """Pallas/JAX port of TopLoss(size) from UnetWithTopologicalLossTraining.py."""

    def __init__(self, size):
        # size = (width, height), same convention as LevelSetLayer2D
        w, h = size
        self._h, self._w = h, w
        self._cells = _freudenthal_cells(h, w)

    def __call__(self, beta):
        h, w = self._h, self._w
        nv = h * w
        beta = jnp.asarray(beta, jnp.float32).reshape(h, w)

        # TODO(synk): the persistence pairing is sequential/data-dependent and the
        # device->host sync it forces (plus the lack of a custom_vjp) means this
        # forward is not jit/grad-traceable; a compiled pairing backend +
        # jax.pure_callback + custom_vjp would be needed for training use.
        beta_np = np.asarray(beta, np.float64)
        b0, d0, b1, d1 = _persistence_pairs(-beta_np.reshape(-1), self._cells)

        # --- padded / tiled layout -------------------------------------------
        nv_pad128 = _round_up(nv, 128)
        p1_pad = _round_up(len(b1), 128)          # lane-dense pair axis
        # Size the NV tile so a double-buffered selT tile stays well under the
        # scoped-VMEM budget (portable to v7x's smaller VMEM).
        max_sel_tile_bytes = 8 * 1024 * 1024
        tnv_cap = max(128, min(4096, (max_sel_tile_bytes // (4 * p1_pad)) // 128 * 128))
        tnv = nv_pad128 if nv_pad128 <= tnv_cap else tnv_cap
        nv_pad = _round_up(nv_pad128, tnv)
        # TODO(synk): for extremely large dim-1 pair counts (p1_pad >> 16K) the
        # pair axis would also need tiling; not needed at these sizes.

        # Signed count vector: handles ALL barcode-length sums in O(NV).
        c = np.zeros(nv_pad, np.float32)
        np.add.at(c, b0, 1.0)
        np.add.at(c, d0, -1.0)
        np.add.at(c, b1, 1.0)
        np.add.at(c, d1, -1.0)

        # Signed one-hot selection (NV, P1), lane-dense; padded columns stay 0
        # so padded "pairs" contribute 0-length bars.
        selT = np.zeros((nv_pad, p1_pad), np.float32)
        if len(b1) > 0:
            pcols = np.arange(len(b1))
            np.add.at(selT, (b1, pcols), 1.0)
            np.add.at(selT, (d1, pcols), -1.0)

        beta_row = jnp.zeros((1, nv_pad), jnp.float32).at[0, :nv].set(beta.reshape(-1))
        c_row = jnp.asarray(c).reshape(1, nv_pad)
        selT_j = jnp.asarray(selT)

        grid = (nv_pad // tnv,)
        cost = pl.CostEstimate(
            flops=int(2 * nv_pad * p1_pad + 2 * nv_pad),
            transcendentals=0,
            bytes_accessed=int(4 * (2 * nv_pad + nv_pad * p1_pad + 1)),
        )

        out = pl.pallas_call(
            _toploss_kernel,
            out_shape=jax.ShapeDtypeStruct((1, 1), jnp.float32),
            grid_spec=pltpu.PrefetchScalarGridSpec(
                num_scalar_prefetch=0,
                grid=grid,
                in_specs=[
                    pl.BlockSpec((1, tnv), lambda k: (0, k)),          # beta
                    pl.BlockSpec((1, tnv), lambda k: (0, k)),          # counts
                    pl.BlockSpec((tnv, p1_pad), lambda k: (k, 0)),     # selT
                ],
                out_specs=pl.BlockSpec((1, 1), lambda k: (0, 0)),
                scratch_shapes=[
                    pltpu.VMEM((1, 1), jnp.float32),        # running sum(c*beta)
                    pltpu.VMEM((1, p1_pad), jnp.float32),   # running dim-1 lengths
                ],
            ),
            compiler_params=pltpu.CompilerParams(
                dimension_semantics=("arbitrary",),
                vmem_limit_bytes=32 * 1024 * 1024,
            ),
            cost_estimate=cost,
        )(beta_row, c_row, selT_j)
        return out[0, 0]


if __name__ == "__main__":
    H = W = 16
    key = jax.random.PRNGKey(0)
    beta = jax.random.uniform(key, (H, W), dtype=jnp.float32)

    loss_fn = TopLossPallas(size=(W, H))
    loss = jax.block_until_ready(loss_fn(beta))

    # lightweight host sanity check (same barcode-length formula, float64)
    beta64 = np.asarray(beta, np.float64).reshape(-1)
    b0, d0, b1, d1 = _persistence_pairs(-beta64, _freudenthal_cells(H, W))
    l0 = beta64[b0] - beta64[d0]
    l1 = beta64[b1] - beta64[d1]
    ref = l0.sum() + ((l1.sum() - l1.max()) if l1.size else 0.0)
    assert abs(float(loss) - float(ref)) < 1e-3, (float(loss), float(ref))

    print("KERNEL_OK")
</pallas_src>

<mosaic_0001>
module attributes {stable_mosaic.version = 11 : i64} {
  func.func @_toploss_kernel(%arg0: i32, %arg1: memref<1x256xf32, #tpu.memory_space<vmem>>, %arg2: memref<1x256xf32, #tpu.memory_space<vmem>>, %arg3: memref<256x512xf32, #tpu.memory_space<vmem>>, %arg4: memref<1x1xf32, #tpu.memory_space<vmem>>, %arg5: memref<1x1xf32, #tpu.memory_space<vmem>>, %arg6: memref<1x512xf32, #tpu.memory_space<vmem>>) attributes {dimension_semantics = [#tpu.dimension_semantics<arbitrary>], iteration_bounds = array<i64: 1>, scalar_prefetch = 0 : i64, scratch_operands = 2 : i64, tpu.core_type = #tpu.core_type<tc>, window_params = [{transform_indices = @transform_0, window_bounds = array<i64: 1, 256>}, {transform_indices = @transform_1, window_bounds = array<i64: 1, 256>}, {transform_indices = @transform_2, window_bounds = array<i64: 256, 512>}, {pipeline_mode = #tpu.pipeline_mode<synchronous>, transform_indices = @transform_3, window_bounds = array<i64: 1, 1>}]} {
    %c0_i32 = arith.constant 0 : i32
    %0 = arith.cmpi eq, %arg0, %c0_i32 : i32
    %1 = arith.extui %0 : i1 to i32
    %c0_i32_0 = arith.constant 0 : i32
    %2 = arith.cmpi ne, %1, %c0_i32_0 : i32
    scf.if %2 {
      %cst_17 = arith.constant 0.000000e+00 : f32
      %19 = vector.broadcast %cst_17 : f32 to vector<1x1xf32>
      %c0_18 = arith.constant 0 : index
      %c0_19 = arith.constant 0 : index
      %20 = vector.load %arg5[%c0_18, %c0_19] : memref<1x1xf32, #tpu.memory_space<vmem>>, vector<1x1xf32>
      tpu.vector_store %arg5[%c0_18, %c0_19], %19 {strides = array<i32>} : memref<1x1xf32, #tpu.memory_space<vmem>>, vector<1x1xf32>,
      %cst_20 = arith.constant 0.000000e+00 : f32
      %21 = vector.broadcast %cst_20 : f32 to vector<1x512xf32>
      %c0_21 = arith.constant 0 : index
      %c0_22 = arith.constant 0 : index
      %22 = vector.load %arg6[%c0_21, %c0_22] : memref<1x512xf32, #tpu.memory_space<vmem>>, vector<1x512xf32>
      tpu.vector_store %arg6[%c0_21, %c0_22], %21 {strides = array<i32>} : memref<1x512xf32, #tpu.memory_space<vmem>>, vector<1x512xf32>,
    } else {
    }
    %c0 = arith.constant 0 : index
    %c0_1 = arith.constant 0 : index
    %3 = vector.load %arg1[%c0, %c0_1] : memref<1x256xf32, #tpu.memory_space<vmem>>, vector<1x256xf32>
    %c0_2 = arith.constant 0 : index
    %c0_3 = arith.constant 0 : index
    %4 = vector.load %arg5[%c0_2, %c0_3] : memref<1x1xf32, #tpu.memory_space<vmem>>, vector<1x1xf32>
    %c0_4 = arith.constant 0 : index
    %c0_5 = arith.constant 0 : index
    %5 = vector.load %arg2[%c0_4, %c0_5] : memref<1x256xf32, #tpu.memory_space<vmem>>, vector<1x256xf32>
    %6 = arith.mulf %5, %3 : vector<1x256xf32>
    %cst = arith.constant dense<0.000000e+00> : vector<1xf32>
    %7 = vector.multi_reduction <add>, %6, %cst [1] : vector<1x256xf32> to vector<1xf32>
    %8 = vector.shape_cast %7 : vector<1xf32> to vector<1x1xf32>
    %9 = arith.addf %4, %8 : vector<1x1xf32>
    %c0_6 = arith.constant 0 : index
    %c0_7 = arith.constant 0 : index
    %10 = vector.load %arg5[%c0_6, %c0_7] : memref<1x1xf32, #tpu.memory_space<vmem>>, vector<1x1xf32>
    tpu.vector_store %arg5[%c0_6, %c0_7], %9 {strides = array<i32>} : memref<1x1xf32, #tpu.memory_space<vmem>>, vector<1x1xf32>,
    %c0_8 = arith.constant 0 : index
    %c0_9 = arith.constant 0 : index
    %11 = vector.load %arg6[%c0_8, %c0_9] : memref<1x512xf32, #tpu.memory_space<vmem>>, vector<1x512xf32>
    %c0_10 = arith.constant 0 : index
    %c0_11 = arith.constant 0 : index
    %12 = vector.load %arg3[%c0_10, %c0_11] : memref<256x512xf32, #tpu.memory_space<vmem>>, vector<256x512xf32>
    %cst_12 = arith.constant dense<0.000000e+00> : vector<1x512xf32>
    %13 = tpu.matmul %3, %12, %cst_12 {dimension_numbers = #tpu.dot_dimension_numbers<[1], [0], [0], [1], [0, 0, 1, 1], [], []>} : vector<1x256xf32>, vector<256x512xf32>, vector<1x512xf32> -> vector<1x512xf32>
    %14 = arith.addf %11, %13 : vector<1x512xf32>
    %c0_13 = arith.constant 0 : index
    %c0_14 = arith.constant 0 : index
    %15 = vector.load %arg6[%c0_13, %c0_14] : memref<1x512xf32, #tpu.memory_space<vmem>>, vector<1x512xf32>
    tpu.vector_store %arg6[%c0_13, %c0_14], %14 {strides = array<i32>} : memref<1x512xf32, #tpu.memory_space<vmem>>, vector<1x512xf32>,
    %c0_i32_15 = arith.constant 0 : i32
    %16 = arith.cmpi eq, %arg0, %c0_i32_15 : i32
    %17 = arith.extui %16 : i1 to i32
    %c0_i32_16 = arith.constant 0 : i32
    %18 = arith.cmpi ne, %17, %c0_i32_16 : i32
    scf.if %18 {
      %c0_17 = arith.constant 0 : index
      %c0_18 = arith.constant 0 : index
      %19 = vector.load %arg6[%c0_17, %c0_18] : memref<1x512xf32, #tpu.memory_space<vmem>>, vector<1x512xf32>
      %cst_19 = arith.constant dense<0xFF800000> : vector<1xf32>
      %20 = vector.multi_reduction <maximumf>, %19, %cst_19 [1] : vector<1x512xf32> to vector<1xf32>
      %21 = vector.shape_cast %20 : vector<1xf32> to vector<1x1xf32>
      %c0_20 = arith.constant 0 : index
      %c0_21 = arith.constant 0 : index
      %22 = vector.load %arg5[%c0_20, %c0_21] : memref<1x1xf32, #tpu.memory_space<vmem>>, vector<1x1xf32>
      %23 = arith.subf %22, %21 : vector<1x1xf32>
      %c0_22 = arith.constant 0 : index
      %c0_23 = arith.constant 0 : index
      %24 = vector.load %arg4[%c0_22, %c0_23] : memref<1x1xf32, #tpu.memory_space<vmem>>, vector<1x1xf32>
      tpu.vector_store %arg4[%c0_22, %c0_23], %23 {strides = array<i32>} : memref<1x1xf32, #tpu.memory_space<vmem>>, vector<1x1xf32>,
    } else {
    }
    return
  }
  func.func @transform_0(%arg0: i32) -> (i32, i32) {
    %c0_i32 = arith.constant 0 : i32
    %c0_i32_0 = arith.constant 0 : i32
    return %c0_i32, %arg0 : i32, i32
  }
  func.func @transform_1(%arg0: i32) -> (i32, i32) {
    %c0_i32 = arith.constant 0 : i32
    %c0_i32_0 = arith.constant 0 : i32
    return %c0_i32, %arg0 : i32, i32
  }
  func.func @transform_2(%arg0: i32) -> (i32, i32) {
    %c0_i32 = arith.constant 0 : i32
    %c0_i32_0 = arith.constant 0 : i32
    return %arg0, %c0_i32 : i32, i32
  }
  func.func @transform_3(%arg0: i32) -> (i32, i32) {
    %c0_i32 = arith.constant 0 : i32
    %c0_i32_0 = arith.constant 0 : i32
    %c0_i32_1 = arith.constant 0 : i32
    return %c0_i32, %c0_i32_0 : i32, i32
  }
}

</mosaic_0001>

<llo_original>
// kernel: tpu_custom_call.1
$region0: #{tpu_custom_call.1}
  #allocation0 [shape = 'u32[]', space=smem, size = 0x4, offset = 0x4, fixed_abs, tag = 'smem constant byte address 0x4 - core index']
  #allocation1 [shape = 'u32[144,128]{1,0:T(1,128)}', space=vmem, size = 0x12000, scoped, tag = 'internal scratch']
  #allocation2 [shape = 'f32[1,1]{1,0:T(1,128)}', space=vmem, size = 0x200, scoped, tag = 'scratch operand']
  #allocation3 [shape = 'f32[1,512]{1,0:T(1,128)}', space=vmem, size = 0x800, scoped, tag = 'scratch operand']
  %s0 = inlined_call_operand.hbm [shape: f32[1,256], index: 0, kind: input, shape index: {}]
  %s1 = inlined_call_operand.hbm [shape: f32[1,256], index: 1, kind: input, shape index: {}]
  %s2 = inlined_call_operand.hbm [shape: f32[256,512], index: 2, kind: input, shape index: {}]
  %s3 = inlined_call_operand.hbm [shape: f32[1,1], index: 3, kind: output, shape index: {}]
  %s4 = sld [smem:[#allocation0]]
  $region42: #{tpu_custom_call.1} parent=0
    _
  %s6 = ssub.s32 1, %s4
  %s7 = scalar_select 0, %s6, %s4
  $region1: #{tpu_custom_call.1} parent=0
    #allocation4 [shape = 'u8[1024]{0}', space=vmem, size = 0x400, scoped, tag = 'input window, operand 0, single buffered']
    #allocation5 [shape = 's32[1]{0}', space=sflag, size = 0x4, scoped, tag = 'scoped memory for tpu_custom_call.1']
    #allocation6 [shape = 's32[1]{0}', space=sflag, size = 0x4, scoped, tag = 'scoped memory for tpu_custom_call.1']
    #allocation7 [shape = 'u8[1024]{0}', space=vmem, size = 0x400, scoped, tag = 'input window, operand 1, single buffered']
    #allocation8 [shape = 's32[1]{0}', space=sflag, size = 0x4, scoped, tag = 'scoped memory for tpu_custom_call.1']
    #allocation9 [shape = 'u8[524288]{0}', space=vmem, size = 0x80000, scoped, tag = 'input window, operand 2, single buffered']
    #allocation10 [shape = 'u8[512]{0}', space=vmem, size = 0x400, scoped, tag = 'output window, operand 0, single buffered']
    %8 = vsyncpa [#allocation5], 0
    %9 = vsyncpa [#allocation8], 0
    %10 = vsyncpa [#allocation6], 0
    // Predicated region
    $region2: #{tpu_custom_call.1} parent=1 // pred_check
      _
    $region3: #{tpu_custom_call.1} parent=1 // pred_check_branch
      %12 = sbr.rel (0) target = $region5
    $region4: #{tpu_custom_call.1} parent=1 // pred_region
      %s14 = ssub.s32 32, 32
      %15 = vsyncadd [#allocation5], %s14
      %s17 = sshll.u32 [#allocation4], 4
      %s18 = int_to_ptr.vmem [resolvable:$true] %s17
      %20 = dma.hbm_to_vmem [thread:$0]  %s0, 32, %s18, [#allocation5]
    $region5: #{tpu_custom_call.1} parent=1 // pred_fallthru
      _
    // Predicated region
    $region6: #{tpu_custom_call.1} parent=1 // pred_check
      _
    $region7: #{tpu_custom_call.1} parent=1 // pred_check_branch
      %22 = sbr.rel (0) target = $region9
    $region8: #{tpu_custom_call.1} parent=1 // pred_region
      %s24 = ssub.s32 32, 32
      %25 = vsyncadd [#allocation8], %s24
      %s27 = sshll.u32 [#allocation7], 4
      %s28 = int_to_ptr.vmem [resolvable:$true] %s27
      %30 = dma.hbm_to_vmem [thread:$0]  %s1, 32, %s28, [#allocation8]
    $region9: #{tpu_custom_call.1} parent=1 // pred_fallthru
      _
    // Predicated region
    $region10: #{tpu_custom_call.1} parent=1 // pred_check
      _
    $region11: #{tpu_custom_call.1} parent=1 // pred_check_branch
      %32 = sbr.rel (0) target = $region13
    $region12: #{tpu_custom_call.1} parent=1 // pred_region
      %s34 = ssub.s32 16384, 16384
      %35 = vsyncadd [#allocation8], %s34
      %s36 = sshll.u32 [#allocation9], 4
      %s37 = int_to_ptr.vmem [resolvable:$true] %s36
      %42 = dma.hbm_to_vmem [thread:$0]  %s2, 16384, %s37, [#allocation8], 512, 512, 32
    $region13: #{tpu_custom_call.1} parent=1 // pred_fallthru
      _
    // Predicated region
    $region14: #{tpu_custom_call.1} parent=1 // pred_check
      _
    $region15: #{tpu_custom_call.1} parent=1 // pred_check_branch
      %44 = sbr.rel (0) target = $region17
    $region16: #{tpu_custom_call.1} parent=1 // pred_region
      %45 = dma.done [#allocation5], 32
    $region17: #{tpu_custom_call.1} parent=1 // pred_fallthru
      _
    // Predicated region
    $region18: #{tpu_custom_call.1} parent=1 // pred_check
      _
    $region19: #{tpu_custom_call.1} parent=1 // pred_check_branch
      %47 = sbr.rel (0) target = $region21
    $region20: #{tpu_custom_call.1} parent=1 // pred_region
      %48 = dma.done [#allocation8], 32
    $region21: #{tpu_custom_call.1} parent=1 // pred_fallthru
      _
    // Predicated region
    $region22: #{tpu_custom_call.1} parent=1 // pred_check
      _
    $region23: #{tpu_custom_call.1} parent=1 // pred_check_branch
      %50 = sbr.rel (0) target = $region25
    $region24: #{tpu_custom_call.1} parent=1 // pred_region
      %51 = dma.done [#allocation8], 16384
    $region25: #{tpu_custom_call.1} parent=1 // pred_fallthru
      _
    %p52 = scmp.eq.s32.totalorder 0, 0
    // Predicated region
    $region26: #{tpu_custom_call.1} parent=1 // pred_check
      %p53 = pneg %p52
    $region27: #{tpu_custom_call.1} parent=1 // pred_check_branch
      %55 = sbr.rel (%p53) target = $region29
    $region28: #{tpu_custom_call.1} parent=1 // pred_region
      %vm56 = vcmask 0
      %57 = vst.msk [vmem:[#allocation2] sm:$0x1] %vm56, 0.0
      %v58 = vlaneseq
      %vm59 = vcmp.ge.s32.totalorder %v58, 0
      %vm60 = vcmp.lt.s32.totalorder %v58, 512
      %vm61 = vmand %vm59, %vm60
      %62 = vst.msk [vmem:[#allocation3] sm:$0xf] %vm61, 0.0
    $region29: #{tpu_custom_call.1} parent=1 // pred_fallthru
      _
    %v63 = vld [vmem:[#allocation4] sm:$0x3]
    %v64 = vld [vmem:[#allocation2] sm:$0x1]
    %v65 = vld [vmem:[#allocation7] sm:$0x3]
    %v66 = vmul.f32 %v65, %v63
    %v68 = vlaneseq
    %v69 = vshrl.u32 %v68, 7
    %v70 = vsub.s32 0, %v69
    %v71 = vrot.slane %v66, %v70
    %v72 = vlaneseq
    %v73 = vshrl.u32 %v72, 7
    %v74 = vsub.s32 1, %v73
    %v75 = vrot.slane %v66, %v74
    %vm78 = vcmask 1040384
    %v79 = vsel %vm78, %v71, 0.0
    %v80 = vsel %vm78, %v75, 0.0
    %v81 = vadd.f32 %v79, %v80
    %82 = vadd.xlane.f32.xlu0 %v81
    %v83 = vpop.xlane.xlu0 %82
    %v84 = vadd.f32 %v64, %v83
    %vm85 = vcmask 0
    %86 = vst.msk [vmem:[#allocation2] sm:$0x1] %vm85, %v84
    %v87 = vld [vmem:[#allocation3] sm:$0xf]
    %v88 = vld [vmem:[#allocation9] sm:$0xff]
    %v89 = vld [vmem:[#allocation9 + $0x8] sm:$0xff]
    %v90 = vld [vmem:[#allocation9 + $0x10] sm:$0xff]
    %v91 = vld [vmem:[#allocation9 + $0x18] sm:$0xff]
    %v92 = vld [vmem:[#allocation9 + $0x20] sm:$0xff]
    %v93 = vld [vmem:[#allocation9 + $0x28] sm:$0xff]
    %v94 = vld [vmem:[#allocation9 + $0x30] sm:$0xff]
    %v95 = vld [vmem:[#allocation9 + $0x38] sm:$0xff]
    %v96 = vld [vmem:[#allocation9 + $0x40] sm:$0xff]
    %v97 = vld [vmem:[#allocation9 + $0x48] sm:$0xff]
    %v98 = vld [vmem:[#allocation9 + $0x50] sm:$0xff]
    %v99 = vld [vmem:[#allocation9 + $0x58] sm:$0xff]
    %v100 = vld [vmem:[#allocation9 + $0x60] sm:$0xff]
    %v101 = vld [vmem:[#allocation9 + $0x68] sm:$0xff]
    %v102 = vld [vmem:[#allocation9 + $0x70] sm:$0xff]
    %v103 = vld [vmem:[#allocation9 + $0x78] sm:$0xff]
    %v104 = vld [vmem:[#allocation9 + $0x80] sm:$0xff]
    %v105 = vld [vmem:[#allocation9 + $0x88] sm:$0xff]
    %v106 = vld [vmem:[#allocation9 + $0x90] sm:$0xff]
    %v107 = vld [vmem:[#allocation9 + $0x98] sm:$0xff]
    %v108 = vld [vmem:[#allocation9 + $0xa0] sm:$0xff]
    %v109 = vld [vmem:[#allocation9 + $0xa8] sm:$0xff]
    %v110 = vld [vmem:[#allocation9 + $0xb0] sm:$0xff]
    %v111 = vld [vmem:[#allocation9 + $0xb8] sm:$0xff]
    %v112 = vld [vmem:[#allocation9 + $0xc0] sm:$0xff]
    %v113 = vld [vmem:[#allocation9 + $0xc8] sm:$0xff]
    %v114 = vld [vmem:[#allocation9 + $0xd0] sm:$0xff]
    %v115 = vld [vmem:[#allocation9 + $0xd8] sm:$0xff]
    %v116 = vld [vmem:[#allocation9 + $0xe0] sm:$0xff]
    %v117 = vld [vmem:[#allocation9 + $0xe8] sm:$0xff]
    %v118 = vld [vmem:[#allocation9 + $0xf0] sm:$0xff]
    %v119 = vld [vmem:[#allocation9 + $0xf8] sm:$0xff]
    %v120 = vld [vmem:[#allocation9 + $0x100] sm:$0xff]
    %v121 = vld [vmem:[#allocation9 + $0x108] sm:$0xff]
    %v122 = vld [vmem:[#allocation9 + $0x110] sm:$0xff]
    %v123 = vld [vmem:[#allocation9 + $0x118] sm:$0xff]
    %v124 = vld [vmem:[#allocation9 + $0x120] sm:$0xff]
    %v125 = vld [vmem:[#allocation9 + $0x128] sm:$0xff]
    %v126 = vld [vmem:[#allocation9 + $0x130] sm:$0xff]
    %v127 = vld [vmem:[#allocation9 + $0x138] sm:$0xff]
    %v128 = vld [vmem:[#allocation9 + $0x140] sm:$0xff]
    %v129 = vld [vmem:[#allocation9 + $0x148] sm:$0xff]
    %v130 = vld [vmem:[#allocation9 + $0x150] sm:$0xff]
    %v131 = vld [vmem:[#allocation9 + $0x158] sm:$0xff]
    %v132 = vld [vmem:[#allocation9 + $0x160] sm:$0xff]
    %v133 = vld [vmem:[#allocation9 + $0x168] sm:$0xff]
    %v134 = vld [vmem:[#allocation9 + $0x170] sm:$0xff]
    %v135 = vld [vmem:[#allocation9 + $0x178] sm:$0xff]
    %v136 = vld [vmem:[#allocation9 + $0x180] sm:$0xff]
    %v137 = vld [vmem:[#allocation9 + $0x188] sm:$0xff]
    %v138 = vld [vmem:[#allocation9 + $0x190] sm:$0xff]
    %v139 = vld [vmem:[#allocation9 + $0x198] sm:$0xff]
    %v140 = vld [vmem:[#allocation9 + $0x1a0] sm:$0xff]
    %v141 = vld [vmem:[#allocation9 + $0x1a8] sm:$0xff]
    %v142 = vld [vmem:[#allocation9 + $0x1b0] sm:$0xff]
    %v143 = vld [vmem:[#allocation9 + $0x1b8] sm:$0xff]
    %v144 = vld [vmem:[#allocation9 + $0x1c0] sm:$0xff]
    %v145 = vld [vmem:[#allocation9 + $0x1c8] sm:$0xff]
    %v146 = vld [vmem:[#allocation9 + $0x1d0] sm:$0xff]
    %v147 = vld [vmem:[#allocation9 + $0x1d8] sm:$0xff]
    %v148 = vld [vmem:[#allocation9 + $0x1e0] sm:$0xff]
    %v149 = vld [vmem:[#allocation9 + $0x1e8] sm:$0xff]
    %v150 = vld [vmem:[#allocation9 + $0x1f0] sm:$0xff]
    %v151 = vld [vmem:[#allocation9 + $0x1f8] sm:$0xff]
    %v152 = vld [vmem:[#allocation9 + $0x200] sm:$0xff]
    %v153 = vld [vmem:[#allocation9 + $0x208] sm:$0xff]
    %v154 = vld [vmem:[#allocation9 + $0x210] sm:$0xff]
    %v155 = vld [vmem:[#allocation9 + $0x218] sm:$0xff]
    %v156 = vld [vmem:[#allocation9 + $0x220] sm:$0xff]
    %v157 = vld [vmem:[#allocation9 + $0x228] sm:$0xff]
    %v158 = vld [vmem:[#allocation9 + $0x230] sm:$0xff]
    %v159 = vld [vmem:[#allocation9 + $0x238] sm:$0xff]
    %v160 = vld [vmem:[#allocation9 + $0x240] sm:$0xff]
    %v161 = vld [vmem:[#allocation9 + $0x248] sm:$0xff]
    %v162 = vld [vmem:[#allocation9 + $0x250] sm:$0xff]
    %v163 = vld [vmem:[#allocation9 + $0x258] sm:$0xff]
    %v164 = vld [vmem:[#allocation9 + $0x260] sm:$0xff]
    %v165 = vld [vmem:[#allocation9 + $0x268] sm:$0xff]
    %v166 = vld [vmem:[#allocation9 + $0x270] sm:$0xff]
    %v167 = vld [vmem:[#allocation9 + $0x278] sm:$0xff]
    %v168 = vld [vmem:[#allocation9 + $0x280] sm:$0xff]
    %v169 = vld [vmem:[#allocation9 + $0x288] sm:$0xff]
    %v170 = vld [vmem:[#allocation9 + $0x290] sm:$0xff]
    %v171 = vld [vmem:[#allocation9 + $0x298] sm:$0xff]
    %v172 = vld [vmem:[#allocation9 + $0x2a0] sm:$0xff]
    %v173 = vld [vmem:[#allocation9 + $0x2a8] sm:$0xff]
    %v174 = vld [vmem:[#allocation9 + $0x2b0] sm:$0xff]
    %v175 = vld [vmem:[#allocation9 + $0x2b8] sm:$0xff]
    %v176 = vld [vmem:[#allocation9 + $0x2c0] sm:$0xff]
    %v177 = vld [vmem:[#allocation9 + $0x2c8] sm:$0xff]
    %v178 = vld [vmem:[#allocation9 + $0x2d0] sm:$0xff]
    %v179 = vld [vmem:[#allocation9 + $0x2d8] sm:$0xff]
    %v180 = vld [vmem:[#allocation9 + $0x2e0] sm:$0xff]
    %v181 = vld [vmem:[#allocation9 + $0x2e8] sm:$0xff]
    %v182 = vld [vmem:[#allocation9 + $0x2f0] sm:$0xff]
    %v183 = vld [vmem:[#allocation9 + $0x2f8] sm:$0xff]
    %v184 = vld [vmem:[#allocation9 + $0x300] sm:$0xff]
    %v185 = vld [vmem:[#allocation9 + $0x308] sm:$0xff]
    %v186 = vld [vmem:[#allocation9 + $0x310] sm:$0xff]
    %v187 = vld [vmem:[#allocation9 + $0x318] sm:$0xff]
    %v188 = vld [vmem:[#allocation9 + $0x320] sm:$0xff]
    %v189 = vld [vmem:[#allocation9 + $0x328] sm:$0xff]
    %v190 = vld [vmem:[#allocation9 + $0x330] sm:$0xff]
    %v191 = vld [vmem:[#allocation9 + $0x338] sm:$0xff]
    %v192 = vld [vmem:[#allocation9 + $0x340] sm:$0xff]
    %v193 = vld [vmem:[#allocation9 + $0x348] sm:$0xff]
    %v194 = vld [vmem:[#allocation9 + $0x350] sm:$0xff]
    %v195 = vld [vmem:[#allocation9 + $0x358] sm:$0xff]
    %v196 = vld [vmem:[#allocation9 + $0x360] sm:$0xff]
    %v197 = vld [vmem:[#allocation9 + $0x368] sm:$0xff]
    %v198 = vld [vmem:[#allocation9 + $0x370] sm:$0xff]
    %v199 = vld [vmem:[#allocation9 + $0x378] sm:$0xff]
    %v200 = vld [vmem:[#allocation9 + $0x380] sm:$0xff]
    %v201 = vld [vmem:[#allocation9 + $0x388] sm:$0xff]
    %v202 = vld [vmem:[#allocation9 + $0x390] sm:$0xff]
    %v203 = vld [vmem:[#allocation9 + $0x398] sm:$0xff]
    %v204 = vld [vmem:[#allocation9 + $0x3a0] sm:$0xff]
    %v205 = vld [vmem:[#allocation9 + $0x3a8] sm:$0xff]
    %v206 = vld [vmem:[#allocation9 + $0x3b0] sm:$0xff]
    %v207 = vld [vmem:[#allocation9 + $0x3b8] sm:$0xff]
    %v208 = vld [vmem:[#allocation9 + $0x3c0] sm:$0xff]
    %v209 = vld [vmem:[#allocation9 + $0x3c8] sm:$0xff]
    %v210 = vld [vmem:[#allocation9 + $0x3d0] sm:$0xff]
    %v211 = vld [vmem:[#allocation9 + $0x3d8] sm:$0xff]
    %v212 = vld [vmem:[#allocation9 + $0x3e0] sm:$0xff]
    %v213 = vld [vmem:[#allocation9 + $0x3e8] sm:$0xff]
    %v214 = vld [vmem:[#allocation9 + $0x3f0] sm:$0xff]
    %v215 = vld [vmem:[#allocation9 + $0x3f8] sm:$0xff]
    %v217 = vlaneseq
    %v218 = vshrl.u32 %v217, 7
    %v219 = vsub.s32 0, %v218
    %v220 = vrot.slane %v63, %v219
    %v221 = vlaneseq
    %v222 = vshrl.u32 %v221, 7
    %v223 = vsub.s32 1, %v222
    %v224 = vrot.slane %v63, %v223
    %227 = vmatprep.subr.mxu0 %v149
    %228 = vmatpush1.msra.mxu0 %v148
    %229 = vmatprep.subr.mxu0 %v145
    %230 = vmatpush1.msra.mxu0 %v144
    %231 = vmatprep.subr.mxu0 %v141
    %232 = vmatpush1.msra.mxu0 %v140
    %233 = vmatprep.subr.mxu0 %v137
    %234 = vmatpush1.msra.mxu0 %v136
    %235 = vmatprep.subr.mxu0 %v133
    %236 = vmatpush1.msra.mxu0 %v132
    %237 = vmatprep.subr.mxu0 %v129
    %238 = vmatpush1.msra.mxu0 %v128
    %239 = vmatprep.subr.mxu0 %v125
    %240 = vmatpush1.msra.mxu0 %v124
    %241 = vmatprep.subr.mxu0 %v121
    %242 = vmatpush1.msra.mxu0 %v120
    %243 = vmatprep.subr.mxu0 %v117
    %244 = vmatpush1.msra.mxu0 %v116
    %245 = vmatprep.subr.mxu0 %v113
    %246 = vmatpush1.msra.mxu0 %v112
    %247 = vmatprep.subr.mxu0 %v109
    %248 = vmatpush1.msra.mxu0 %v108
    %249 = vmatprep.subr.mxu0 %v105
    %250 = vmatpush1.msra.mxu0 %v104
    %251 = vmatprep.subr.mxu0 %v101
    %252 = vmatpush1.msra.mxu0 %v100
    %253 = vmatprep.subr.mxu0 %v97
    %254 = vmatpush1.msra.mxu0 %v96
    %255 = vmatprep.subr.mxu0 %v93
    %256 = vmatpush1.msra.mxu0 %v92
    %257 = vmatprep.subr.mxu0 %v89
    %258 = vmatpush1.msra.mxu0 %v88
    %259 = vmatprep.subr.mxu0 %v213
    %260 = vmatpush2.msra.mxu0 %v212
    %261 = vmatprep.subr.mxu0 %v209
    %262 = vmatpush2.msra.mxu0 %v208
    %263 = vmatprep.subr.mxu0 %v205
    %264 = vmatpush2.msra.mxu0 %v204
    %265 = vmatprep.subr.mxu0 %v201
    %266 = vmatpush2.msra.mxu0 %v200
    %267 = vmatprep.subr.mxu0 %v197
    %268 = vmatpush2.msra.mxu0 %v196
    %269 = vmatprep.subr.mxu0 %v193
    %270 = vmatpush2.msra.mxu0 %v192
    %271 = vmatprep.subr.mxu0 %v189
    %272 = vmatpush2.msra.mxu0 %v188
    %273 = vmatprep.subr.mxu0 %v185
    %274 = vmatpush2.msra.mxu0 %v184
    %275 = vmatprep.subr.mxu0 %v181
    %276 = vmatpush2.msra.mxu0 %v180
    %277 = vmatprep.subr.mxu0 %v177
    %278 = vmatpush2.msra.mxu0 %v176
    %279 = vmatprep.subr.mxu0 %v173
    %280 = vmatpush2.msra.mxu0 %v172
    %281 = vmatprep.subr.mxu0 %v169
    %282 = vmatpush2.msra.mxu0 %v168
    %283 = vmatprep.subr.mxu0 %v165
    %284 = vmatpush2.msra.mxu0 %v164
    %285 = vmatprep.subr.mxu0 %v161
    %286 = vmatpush2.msra.mxu0 %v160
    %287 = vmatprep.subr.mxu0 %v157
    %288 = vmatpush2.msra.mxu0 %v156
    %289 = vmatprep.subr.mxu0 %v153
    %290 = vmatpush2.msra.mxu0 %v152
    %291 = vmatprep.mubr.f32.mxu0 %v224
    %292 = vmatmul.mubr.f32.gmra.mxu0 %v220
    %v293 = vpop.f32.mrf.mxu0
    %v294 = vadd.f32 0.0, %v293
    %v295 = vpop.f32.mrf.mxu0
    %v296 = vadd.f32 0.0, %v295
    %297 = vdwg.mxu0
    %298 = vmatprep.subr.mxu0 %v151
    %299 = vmatpush1.msra.mxu0 %v150
    %300 = vmatprep.subr.mxu0 %v147
    %301 = vmatpush1.msra.mxu0 %v146
    %302 = vmatprep.subr.mxu0 %v143
    %303 = vmatpush1.msra.mxu0 %v142
    %304 = vmatprep.subr.mxu0 %v139
    %305 = vmatpush1.msra.mxu0 %v138
    %306 = vmatprep.subr.mxu0 %v135
    %307 = vmatpush1.msra.mxu0 %v134
    %308 = vmatprep.subr.mxu0 %v131
    %309 = vmatpush1.msra.mxu0 %v130
    %310 = vmatprep.subr.mxu0 %v127
    %311 = vmatpush1.msra.mxu0 %v126
    %312 = vmatprep.subr.mxu0 %v123
    %313 = vmatpush1.msra.mxu0 %v122
    %314 = vmatprep.subr.mxu0 %v119
    %315 = vmatpush1.msra.mxu0 %v118
    %316 = vmatprep.subr.mxu0 %v115
    %317 = vmatpush1.msra.mxu0 %v114
    %318 = vmatprep.subr.mxu0 %v111
    %319 = vmatpush1.msra.mxu0 %v110
    %320 = vmatprep.subr.mxu0 %v107
    %321 = vmatpush1.msra.mxu0 %v106
    %322 = vmatprep.subr.mxu0 %v103
    %323 = vmatpush1.msra.mxu0 %v102
    %324 = vmatprep.subr.mxu0 %v99
    %325 = vmatpush1.msra.mxu0 %v98
    %326 = vmatprep.subr.mxu0 %v95
    %327 = vmatpush1.msra.mxu0 %v94
    %328 = vmatprep.subr.mxu0 %v91
    %329 = vmatpush1.msra.mxu0 %v90
    %330 = vmatprep.subr.mxu0 %v215
    %331 = vmatpush2.msra.mxu0 %v214
    %332 = vmatprep.subr.mxu0 %v211
    %333 = vmatpush2.msra.mxu0 %v210
    %334 = vmatprep.subr.mxu0 %v207
    %335 = vmatpush2.msra.mxu0 %v206
    %336 = vmatprep.subr.mxu0 %v203
    %337 = vmatpush2.msra.mxu0 %v202
    %338 = vmatprep.subr.mxu0 %v199
    %339 = vmatpush2.msra.mxu0 %v198
    %340 = vmatprep.subr.mxu0 %v195
    %341 = vmatpush2.msra.mxu0 %v194
    %342 = vmatprep.subr.mxu0 %v191
    %343 = vmatpush2.msra.mxu0 %v190
    %344 = vmatprep.subr.mxu0 %v187
    %345 = vmatpush2.msra.mxu0 %v186
    %346 = vmatprep.subr.mxu0 %v183
    %347 = vmatpush2.msra.mxu0 %v182
    %348 = vmatprep.subr.mxu0 %v179
    %349 = vmatpush2.msra.mxu0 %v178
    %350 = vmatprep.subr.mxu0 %v175
    %351 = vmatpush2.msra.mxu0 %v174
    %352 = vmatprep.subr.mxu0 %v171
    %353 = vmatpush2.msra.mxu0 %v170
    %354 = vmatprep.subr.mxu0 %v167
    %355 = vmatpush2.msra.mxu0 %v166
    %356 = vmatprep.subr.mxu0 %v163
    %357 = vmatpush2.msra.mxu0 %v162
    %358 = vmatprep.subr.mxu0 %v159
    %359 = vmatpush2.msra.mxu0 %v158
    %360 = vmatprep.subr.mxu0 %v155
    %361 = vmatpush2.msra.mxu0 %v154
    %362 = vmatprep.mubr.f32.mxu0 %v224
    %363 = vmatmul.mubr.f32.gmra.mxu0 %v220
    %v364 = vpop.f32.mrf.mxu0
    %v365 = vadd.f32 0.0, %v364
    %v366 = vpop.f32.mrf.mxu0
    %v367 = vadd.f32 0.0, %v366
    %368 = vdwg.mxu0
    %v373 = vcombine.low %v294, %v296
    %v374 = vcombine.low %v365, %v367
    %v376 = vunpack.c.l.s4 1966171168
    %v377 = vunpack.c.0.s8 %v376
    %v378 = vlaneseq
    %v379 = vshrl.u32 %v378, 7
    %v380 = vsub.s32 %v377, %v379
    %v381 = vrot.slane %v373, %v380
    %v383 = vunpack.c.l.s4 1966171168
    %v384 = vunpack.c.0.s8 %v383
    %v385 = vlaneseq
    %v386 = vshrl.u32 %v385, 7
    %v387 = vsub.s32 %v384, %v386
    %v388 = vrot.slane %v374, %v387
    %v389 = vcombine.low %v381, %v388
    %v391 = vunpack.c.l.s4 1966171168
    %v392 = vunpack.c.0.s8 %v391
    %v393 = vlaneseq
    %v394 = vshrl.u32 %v393, 7
    %v395 = vsub.s32 %v392, %v394
    %v396 = vrot.slane %v389, %v395
    %v398 = vadd.f32 %v87, %v396
    %v399 = vlaneseq
    %vm400 = vcmp.ge.s32.totalorder %v399, 0
    %vm401 = vcmp.lt.s32.totalorder %v399, 512
    %vm402 = vmand %vm400, %vm401
    %403 = vst.msk [vmem:[#allocation3] sm:$0xf] %vm402, %v398
    // Predicated region
    $region30: #{tpu_custom_call.1} parent=1 // pred_check
      %p404 = pneg %p52
    $region31: #{tpu_custom_call.1} parent=1 // pred_check_branch
      %406 = sbr.rel (%p404) target = $region33
    $region32: #{tpu_custom_call.1} parent=1 // pred_region
      %v407 = vld [vmem:[#allocation3] sm:$0xf]
      %v409 = vlaneseq
      %v410 = vshrl.u32 %v409, 7
      %v411 = vsub.s32 0, %v410
      %v412 = vrot.slane %v407, %v411
      %v413 = vlaneseq
      %v414 = vshrl.u32 %v413, 7
      %v415 = vsub.s32 1, %v414
      %v416 = vrot.slane %v407, %v415
      %v417 = vlaneseq
      %v418 = vshrl.u32 %v417, 7
      %v419 = vsub.s32 2, %v418
      %v420 = vrot.slane %v407, %v419
      %v421 = vlaneseq
      %v422 = vshrl.u32 %v421, 7
      %v423 = vsub.s32 3, %v422
      %v424 = vrot.slane %v407, %v423
      %v429 = vsel %vm78, %v412, -inf
      %v430 = vsel %vm78, %v416, -inf
      %v431 = vsel %vm78, %v420, -inf
      %v432 = vsel %vm78, %v424, -inf
      %v433 = vmax.f32 %v429, %v430
      %v434 = vmax.f32 %v431, %v432
      %v435 = vmax.f32 %v433, %v434
      %436 = vmax.xlane.f32.xlu0 %v435
      %v437 = vpop.xlane.xlu0 %436
      %v438 = vld [vmem:[#allocation2] sm:$0x1]
      %v439 = vsub.f32 %v438, %v437
      %440 = vst.msk [vmem:[#allocation10] sm:$0x1] %vm85, %v439
    $region33: #{tpu_custom_call.1} parent=1 // pred_fallthru
      _
    // Predicated region
    $region34: #{tpu_custom_call.1} parent=1 // pred_check
      _
    $region35: #{tpu_custom_call.1} parent=1 // pred_check_branch
      %442 = sbr.rel (0) target = $region37
    $region36: #{tpu_custom_call.1} parent=1 // pred_region
      %s444 = ssub.s32 16, 16
      %445 = vsyncadd [#allocation6], %s444
      %s447 = sshll.u32 [#allocation10], 4
      %s448 = int_to_ptr.vmem [resolvable:$true] %s447
      %450 = dma.vmem_to_hbm [thread:$0]  %s448, 16, %s3, [#allocation6]
    $region37: #{tpu_custom_call.1} parent=1 // pred_fallthru
      _
    // Predicated region
    $region38: #{tpu_custom_call.1} parent=1 // pred_check
      _
    $region39: #{tpu_custom_call.1} parent=1 // pred_check_branch
      %452 = sbr.rel (0) target = $region41
    $region40: #{tpu_custom_call.1} parent=1 // pred_region
      %453 = dma.done [#allocation6], 16
    $region41: #{tpu_custom_call.1} parent=1 // pred_fallthru
      _
    %454 = vsyncpa [#allocation5], 1
    %455 = vsyncpa [#allocation8], 1
    %456 = vsyncpa [#allocation6], 1

</llo_original>
